<compile_context>
chip_gen: v6e
topology: v6e:2x2x1
jax: 0.10.0
libtpu: 0.0.40
codegen_flags: <defaults>
</compile_context>

<pallas_src>
import math

import numpy as np
import jax
import jax.numpy as jnp
from jax.experimental import pallas as pl
from jax.experimental.pallas import tpu as pltpu


def _round_up(x, m):
    return (x + m - 1) // m * m


def _cdiv(a, b):
    return -(-a // b)


# ----------------------------- Pallas kernel ------------------------------ #
def _upsample_group_kernel(x_ref, w_ref, b_ref, o_ref):
    # x_ref : [1, tm, K]            (K = (g+1)*C_in, un-padded contraction)
    # w_ref : [K, C_out*g*s]        (channel-major columns, VMEM-resident)
    # b_ref : [C_out]               (SMEM scalars)
    # o_ref : [1, C_out, tm, g*s]   (final layout block; g*s % 128 == 0)
    _, c_out, _, gs = o_ref.shape
    x = x_ref[0]                                          # [tm, K]
    for c in range(c_out):                                # static, small
        acc = jnp.dot(x, w_ref[:, c * gs:(c + 1) * gs],
                      preferred_element_type=jnp.float32)  # [tm, gs] f32
        o_ref[0, c] = (acc + b_ref[c]).astype(o_ref.dtype)


# ----------------------------- parameter setup ---------------------------- #
def orthogonal_weight(key, c_in, c_out, k):
    # mimic nn.init.orthogonal_: flatten to (c_in, c_out*k), orthogonal init.
    w2d = jax.nn.initializers.orthogonal()(key, (c_in, c_out * k), jnp.float32)
    return w2d.reshape(c_in, c_out, k)


def spectral_normalize(weight, key, n_iter=100):
    # PyTorch spectral_norm on ConvTranspose1d uses dim=1:
    #   weight_mat = weight.permute(1, 0, 2).reshape(C_out, C_in*K)
    # TODO(synk): PyTorch runs 1 power iteration per training forward; here the
    # iteration is run to convergence once (deterministic synthetic weights).
    c_in, c_out, k = weight.shape
    wmat = jnp.transpose(weight, (1, 0, 2)).reshape(c_out, c_in * k)
    u0 = jax.random.normal(key, (c_out,), jnp.float32)
    u0 = u0 / (jnp.linalg.norm(u0) + 1e-12)
    v0 = jnp.zeros((c_in * k,), jnp.float32)

    def body(_, uv):
        u, v = uv
        v = wmat.T @ u
        v = v / (jnp.linalg.norm(v) + 1e-12)
        u = wmat @ v
        u = u / (jnp.linalg.norm(u) + 1e-12)
        return (u, v)

    u, v = jax.lax.fori_loop(0, n_iter, body, (u0, v0))
    sigma = u @ (wmat @ v)
    return weight / sigma


# ----------------------------- forward wrapper ----------------------------- #
def upsample_net_forward(x, weight, bias, upsample_factor,
                         compute_dtype=jnp.bfloat16, out_dtype=None):
    """x: [N, C_in, L] (NCL, like PyTorch).  Returns [N, C_out, L*s]."""
    n, c_in, length = x.shape
    s = int(upsample_factor)
    c_in_w, c_out, k = weight.shape
    assert c_in_w == c_in and k == 2 * s
    p = s // 2
    out_dtype = x.dtype if out_dtype is None else out_dtype

    # Full (un-cropped) transposed-conv output has (L+1)*s samples (frames
    # m = 0..L); the PyTorch module (crop by `padding`, then trim to L*s)
    # returns full[:, :, p : p + L*s] for BOTH even and odd s.
    #   frame_m = x[m] @ Wa + x[m-1] @ Wb    (zero x outside [0, L-1])

    # Group g frames per matmul row so one channel-group spans g*s samples,
    # an exact multiple of 128 lanes -> lane-dense, unpadded output stores.
    g = 128 // math.gcd(s, 128)
    gs = g * s
    kdim = (g + 1) * c_in
    n_frames = length + 1
    groups = _cdiv(n_frames, g)

    # ---- tile size (group rows per step): big tiles, >= 2 grid steps -------
    row_out_bytes = c_out * gs * 4
    row_x_bytes = kdim * 2
    budget = 10 * 1024 * 1024                     # per-buffer working-set target
    tm_cap = max(8, min(1024, (budget // (row_out_bytes + row_x_bytes)) // 8 * 8))
    if n == 1 and groups > 8:
        tm = min(tm_cap, _round_up(_cdiv(groups, 2), 8))   # keep >=2 steps (megacore)
    else:
        tm = min(tm_cap, _round_up(groups, 8))
    tm = max(tm, 8)
    groups_pad = _round_up(groups, tm)
    frames_total = groups_pad * g

    # ---- grouped input rows: [N, groups_pad, (g+1)*C_in] -------------------
    # Row r of batch n holds frames x[r*g - 1 .. r*g + g - 1] (zeros at the
    # sequence ends).  Slot 0 = x[r*g - 1], slots 1..g = x[r*g .. r*g+g-1].
    # TODO(synk): for large C_in, feed x via two shifted BlockSpecs instead of
    # materializing this (slightly duplicated) copy; negligible at C_in=4.
    x_t = jnp.transpose(x, (0, 2, 1))                                # [N, L, C_in]
    xf = jnp.pad(x_t, ((0, 0), (1, frames_total - length), (0, 0)))  # [N, F+1, C_in]
    prev = xf[:, :frames_total].reshape(n, groups_pad, g, c_in)[:, :, :1, :]
    cur = xf[:, 1:frames_total + 1].reshape(n, groups_pad, g, c_in)
    xrow = jnp.concatenate([prev, cur], axis=2).reshape(n, groups_pad, kdim)
    xrow = xrow.astype(compute_dtype)

    # ---- block-bidiagonal weight: [(g+1)*C_in, C_out*g*s], channel-major ---
    # column index = c*(g*s) + u*s + j ; row index = slot*C_in + cin
    #   slot u+1 carries Wa = W[:, :, :s]  (taps for x[m])
    #   slot u   carries Wb = W[:, :, s:]  (taps for x[m-1])
    wa = weight[:, :, :s]                       # [C_in, C_out, s]
    wb = weight[:, :, s:]                       # [C_in, C_out, s]
    slot = jnp.arange(g + 1)[:, None]
    uu = jnp.arange(g)[None, :]
    sel_a = (slot == uu + 1).astype(weight.dtype)        # (g+1, g)
    sel_b = (slot == uu).astype(weight.dtype)            # (g+1, g)
    wcat = (jnp.einsum("su,icj->sicuj", sel_a, wa)
            + jnp.einsum("su,icj->sicuj", sel_b, wb))
    wcat = wcat.reshape(kdim, c_out * gs).astype(compute_dtype)

    bias_f32 = bias.astype(jnp.float32)

    total_rows = n * groups_pad
    cost = pl.CostEstimate(
        flops=2 * total_rows * kdim * c_out * gs,
        transcendentals=0,
        bytes_accessed=(total_rows * kdim * xrow.dtype.itemsize
                        + kdim * c_out * gs * wcat.dtype.itemsize
                        + c_out * 4
                        + total_rows * c_out * gs * jnp.dtype(out_dtype).itemsize),
    )

    y = pl.pallas_call(
        _upsample_group_kernel,
        out_shape=jax.ShapeDtypeStruct((n, c_out, groups_pad, gs), out_dtype),
        grid_spec=pltpu.PrefetchScalarGridSpec(
            num_scalar_prefetch=0,
            grid=(n, groups_pad // tm),
            in_specs=[
                pl.BlockSpec((1, tm, kdim), lambda b, i: (b, i, 0)),
                pl.BlockSpec((kdim, c_out * gs), lambda b, i: (0, 0)),
                pl.BlockSpec(memory_space=pltpu.MemorySpace.SMEM),
            ],
            out_specs=pl.BlockSpec((1, c_out, tm, gs),
                                   lambda b, i: (b, 0, i, 0)),
        ),
        compiler_params=pltpu.CompilerParams(
            dimension_semantics=("parallel", "parallel"),
            vmem_limit_bytes=32 * 1024 * 1024),
        cost_estimate=cost,
    )(xrow, wcat, bias_f32)

    # free row-major merge of the last two dims, then the padding trim
    y = y.reshape(n, c_out, groups_pad * gs)
    return y[:, :, p: p + length * s]


# ----------------------------- numpy reference ----------------------------- #
def ref_upsample(x, w, b, s):
    x = np.asarray(x, np.float32)
    w = np.asarray(w, np.float32)
    b = np.asarray(b, np.float32)
    n, c_in, length = x.shape
    _, c_out, k = w.shape
    p = s // 2
    full_len = (length - 1) * s + k
    full = np.zeros((n, c_out, full_len), np.float32)
    for i in range(length):
        for kk in range(k):
            full[:, :, i * s + kk] += np.einsum("nc,cd->nd", x[:, :, i], w[:, :, kk])
    out = full[:, :, p: full_len - p] + b[None, :, None]
    return out[:, :, : length * s]


if __name__ == "__main__":
    # UpsampleNet(input_size=4, output_size=6, upsample_factor=4)
    N, C_IN, L = 2, 4, 16
    C_OUT, S = 6, 4
    K = 2 * S

    key = jax.random.PRNGKey(0)
    kx, kw, kb, ku = jax.random.split(key, 4)

    x = jax.random.normal(kx, (N, C_IN, L), jnp.float32)
    w_raw = orthogonal_weight(kw, C_IN, C_OUT, K)
    w_sn = spectral_normalize(w_raw, ku)
    bias = 0.1 * jax.random.normal(kb, (C_OUT,), jnp.float32)

    out = upsample_net_forward(x, w_sn, bias, S)
    out = jax.block_until_ready(out)

    assert out.shape == (N, C_OUT, L * S), out.shape

    # reference on the bf16-rounded operands (the kernel matmul runs bf16 on
    # the MXU with f32 accumulation)
    x_r = np.asarray(x.astype(jnp.bfloat16).astype(jnp.float32))
    w_r = np.asarray(w_sn.astype(jnp.bfloat16).astype(jnp.float32))
    ref = ref_upsample(x_r, w_r, np.asarray(bias), S)
    np.testing.assert_allclose(np.asarray(out), ref, rtol=1e-3, atol=1e-4)

    print("KERNEL_OK")
</pallas_src>

<mosaic_0001>
module attributes {stable_mosaic.version = 11 : i64} {
  func.func @_upsample_group_kernel(%arg0: i32, %arg1: i32, %arg2: memref<1x8x132xbf16, #tpu.memory_space<vmem>>, %arg3: memref<132x768xbf16, #tpu.memory_space<vmem>>, %arg4: memref<6xf32, #tpu.memory_space<smem>>, %arg5: memref<1x6x8x128xf32, #tpu.memory_space<vmem>>) attributes {dimension_semantics = [#tpu.dimension_semantics<parallel>, #tpu.dimension_semantics<parallel>], iteration_bounds = array<i64: 2, 1>, scalar_prefetch = 0 : i64, scratch_operands = 0 : i64, tpu.core_type = #tpu.core_type<tc>, window_params = [{transform_indices = @transform_0, window_bounds = array<i64: 1, 8, 132>}, {pipeline_mode = #tpu.pipeline_mode<synchronous>, transform_indices = @transform_1, window_bounds = array<i64: 132, 768>}, {transform_indices = @transform_2, window_bounds = array<i64: 6>}, {transform_indices = @transform_3, window_bounds = array<i64: 1, 6, 8, 128>}]} {
    %c0 = arith.constant 0 : index
    %c0_0 = arith.constant 0 : index
    %c0_1 = arith.constant 0 : index
    %0 = vector.load %arg2[%c0, %c0_0, %c0_1] : memref<1x8x132xbf16, #tpu.memory_space<vmem>>, vector<1x8x132xbf16>
    %1 = vector.shape_cast %0 : vector<1x8x132xbf16> to vector<8x132xbf16>
    %c0_2 = arith.constant 0 : index
    %c0_3 = arith.constant 0 : index
    %2 = vector.load %arg3[%c0_2, %c0_3] : memref<132x768xbf16, #tpu.memory_space<vmem>>, vector<132x128xbf16>
    %cst = arith.constant dense<0.000000e+00> : vector<8x128xf32>
    %3 = tpu.matmul %1, %2, %cst {dimension_numbers = #tpu.dot_dimension_numbers<[1], [0], [0], [1], [0, 0, 1, 1], [], []>} : vector<8x132xbf16>, vector<132x128xbf16>, vector<8x128xf32> -> vector<8x128xf32>
    %c0_4 = arith.constant 0 : index
    %4 = memref.load %arg4[%c0_4] : memref<6xf32, #tpu.memory_space<smem>>
    %5 = vector.broadcast %4 : f32 to vector<8x128xf32>
    %6 = arith.addf %3, %5 : vector<8x128xf32>
    %c0_5 = arith.constant 0 : index
    %c0_6 = arith.constant 0 : index
    %c0_7 = arith.constant 0 : index
    %c0_8 = arith.constant 0 : index
    %7 = vector.load %arg5[%c0_5, %c0_6, %c0_7, %c0_8] : memref<1x6x8x128xf32, #tpu.memory_space<vmem>>, vector<1x1x8x128xf32>
    %8 = vector.shape_cast %7 : vector<1x1x8x128xf32> to vector<8x128xf32>
    %9 = vector.shape_cast %6 : vector<8x128xf32> to vector<1x1x8x128xf32>
    tpu.vector_store %arg5[%c0_5, %c0_6, %c0_7, %c0_8], %9 {strides = array<i32>} : memref<1x6x8x128xf32, #tpu.memory_space<vmem>>, vector<1x1x8x128xf32>,
    %c0_9 = arith.constant 0 : index
    %c128 = arith.constant 128 : index
    %10 = vector.load %arg3[%c0_9, %c128] : memref<132x768xbf16, #tpu.memory_space<vmem>>, vector<132x128xbf16>
    %cst_10 = arith.constant dense<0.000000e+00> : vector<8x128xf32>
    %11 = tpu.matmul %1, %10, %cst_10 {dimension_numbers = #tpu.dot_dimension_numbers<[1], [0], [0], [1], [0, 0, 1, 1], [], []>} : vector<8x132xbf16>, vector<132x128xbf16>, vector<8x128xf32> -> vector<8x128xf32>
    %c1 = arith.constant 1 : index
    %12 = memref.load %arg4[%c1] : memref<6xf32, #tpu.memory_space<smem>>
    %13 = vector.broadcast %12 : f32 to vector<8x128xf32>
    %14 = arith.addf %11, %13 : vector<8x128xf32>
    %c0_11 = arith.constant 0 : index
    %c1_12 = arith.constant 1 : index
    %c0_13 = arith.constant 0 : index
    %c0_14 = arith.constant 0 : index
    %15 = vector.load %arg5[%c0_11, %c1_12, %c0_13, %c0_14] : memref<1x6x8x128xf32, #tpu.memory_space<vmem>>, vector<1x1x8x128xf32>
    %16 = vector.shape_cast %15 : vector<1x1x8x128xf32> to vector<8x128xf32>
    %17 = vector.shape_cast %14 : vector<8x128xf32> to vector<1x1x8x128xf32>
    tpu.vector_store %arg5[%c0_11, %c1_12, %c0_13, %c0_14], %17 {strides = array<i32>} : memref<1x6x8x128xf32, #tpu.memory_space<vmem>>, vector<1x1x8x128xf32>,
    %c0_15 = arith.constant 0 : index
    %c256 = arith.constant 256 : index
    %18 = vector.load %arg3[%c0_15, %c256] : memref<132x768xbf16, #tpu.memory_space<vmem>>, vector<132x128xbf16>
    %cst_16 = arith.constant dense<0.000000e+00> : vector<8x128xf32>
    %19 = tpu.matmul %1, %18, %cst_16 {dimension_numbers = #tpu.dot_dimension_numbers<[1], [0], [0], [1], [0, 0, 1, 1], [], []>} : vector<8x132xbf16>, vector<132x128xbf16>, vector<8x128xf32> -> vector<8x128xf32>
    %c2 = arith.constant 2 : index
    %20 = memref.load %arg4[%c2] : memref<6xf32, #tpu.memory_space<smem>>
    %21 = vector.broadcast %20 : f32 to vector<8x128xf32>
    %22 = arith.addf %19, %21 : vector<8x128xf32>
    %c0_17 = arith.constant 0 : index
    %c2_18 = arith.constant 2 : index
    %c0_19 = arith.constant 0 : index
    %c0_20 = arith.constant 0 : index
    %23 = vector.load %arg5[%c0_17, %c2_18, %c0_19, %c0_20] : memref<1x6x8x128xf32, #tpu.memory_space<vmem>>, vector<1x1x8x128xf32>
    %24 = vector.shape_cast %23 : vector<1x1x8x128xf32> to vector<8x128xf32>
    %25 = vector.shape_cast %22 : vector<8x128xf32> to vector<1x1x8x128xf32>
    tpu.vector_store %arg5[%c0_17, %c2_18, %c0_19, %c0_20], %25 {strides = array<i32>} : memref<1x6x8x128xf32, #tpu.memory_space<vmem>>, vector<1x1x8x128xf32>,
    %c0_21 = arith.constant 0 : index
    %c384 = arith.constant 384 : index
    %26 = vector.load %arg3[%c0_21, %c384] : memref<132x768xbf16, #tpu.memory_space<vmem>>, vector<132x128xbf16>
    %cst_22 = arith.constant dense<0.000000e+00> : vector<8x128xf32>
    %27 = tpu.matmul %1, %26, %cst_22 {dimension_numbers = #tpu.dot_dimension_numbers<[1], [0], [0], [1], [0, 0, 1, 1], [], []>} : vector<8x132xbf16>, vector<132x128xbf16>, vector<8x128xf32> -> vector<8x128xf32>
    %c3 = arith.constant 3 : index
    %28 = memref.load %arg4[%c3] : memref<6xf32, #tpu.memory_space<smem>>
    %29 = vector.broadcast %28 : f32 to vector<8x128xf32>
    %30 = arith.addf %27, %29 : vector<8x128xf32>
    %c0_23 = arith.constant 0 : index
    %c3_24 = arith.constant 3 : index
    %c0_25 = arith.constant 0 : index
    %c0_26 = arith.constant 0 : index
    %31 = vector.load %arg5[%c0_23, %c3_24, %c0_25, %c0_26] : memref<1x6x8x128xf32, #tpu.memory_space<vmem>>, vector<1x1x8x128xf32>
    %32 = vector.shape_cast %31 : vector<1x1x8x128xf32> to vector<8x128xf32>
    %33 = vector.shape_cast %30 : vector<8x128xf32> to vector<1x1x8x128xf32>
    tpu.vector_store %arg5[%c0_23, %c3_24, %c0_25, %c0_26], %33 {strides = array<i32>} : memref<1x6x8x128xf32, #tpu.memory_space<vmem>>, vector<1x1x8x128xf32>,
    %c0_27 = arith.constant 0 : index
    %c512 = arith.constant 512 : index
    %34 = vector.load %arg3[%c0_27, %c512] : memref<132x768xbf16, #tpu.memory_space<vmem>>, vector<132x128xbf16>
    %cst_28 = arith.constant dense<0.000000e+00> : vector<8x128xf32>
    %35 = tpu.matmul %1, %34, %cst_28 {dimension_numbers = #tpu.dot_dimension_numbers<[1], [0], [0], [1], [0, 0, 1, 1], [], []>} : vector<8x132xbf16>, vector<132x128xbf16>, vector<8x128xf32> -> vector<8x128xf32>
    %c4 = arith.constant 4 : index
    %36 = memref.load %arg4[%c4] : memref<6xf32, #tpu.memory_space<smem>>
    %37 = vector.broadcast %36 : f32 to vector<8x128xf32>
    %38 = arith.addf %35, %37 : vector<8x128xf32>
    %c0_29 = arith.constant 0 : index
    %c4_30 = arith.constant 4 : index
    %c0_31 = arith.constant 0 : index
    %c0_32 = arith.constant 0 : index
    %39 = vector.load %arg5[%c0_29, %c4_30, %c0_31, %c0_32] : memref<1x6x8x128xf32, #tpu.memory_space<vmem>>, vector<1x1x8x128xf32>
    %40 = vector.shape_cast %39 : vector<1x1x8x128xf32> to vector<8x128xf32>
    %41 = vector.shape_cast %38 : vector<8x128xf32> to vector<1x1x8x128xf32>
    tpu.vector_store %arg5[%c0_29, %c4_30, %c0_31, %c0_32], %41 {strides = array<i32>} : memref<1x6x8x128xf32, #tpu.memory_space<vmem>>, vector<1x1x8x128xf32>,
    %c0_33 = arith.constant 0 : index
    %c640 = arith.constant 640 : index
    %42 = vector.load %arg3[%c0_33, %c640] : memref<132x768xbf16, #tpu.memory_space<vmem>>, vector<132x128xbf16>
    %cst_34 = arith.constant dense<0.000000e+00> : vector<8x128xf32>
    %43 = tpu.matmul %1, %42, %cst_34 {dimension_numbers = #tpu.dot_dimension_numbers<[1], [0], [0], [1], [0, 0, 1, 1], [], []>} : vector<8x132xbf16>, vector<132x128xbf16>, vector<8x128xf32> -> vector<8x128xf32>
    %c5 = arith.constant 5 : index
    %44 = memref.load %arg4[%c5] : memref<6xf32, #tpu.memory_space<smem>>
    %45 = vector.broadcast %44 : f32 to vector<8x128xf32>
    %46 = arith.addf %43, %45 : vector<8x128xf32>
    %c0_35 = arith.constant 0 : index
    %c5_36 = arith.constant 5 : index
    %c0_37 = arith.constant 0 : index
    %c0_38 = arith.constant 0 : index
    %47 = vector.load %arg5[%c0_35, %c5_36, %c0_37, %c0_38] : memref<1x6x8x128xf32, #tpu.memory_space<vmem>>, vector<1x1x8x128xf32>
    %48 = vector.shape_cast %47 : vector<1x1x8x128xf32> to vector<8x128xf32>
    %49 = vector.shape_cast %46 : vector<8x128xf32> to vector<1x1x8x128xf32>
    tpu.vector_store %arg5[%c0_35, %c5_36, %c0_37, %c0_38], %49 {strides = array<i32>} : memref<1x6x8x128xf32, #tpu.memory_space<vmem>>, vector<1x1x8x128xf32>,
    return
  }
  func.func @transform_0(%arg0: i32, %arg1: i32) -> (i32, i32, i32) {
    %c0_i32 = arith.constant 0 : i32
    %c0_i32_0 = arith.constant 0 : i32
    return %arg0, %arg1, %c0_i32 : i32, i32, i32
  }
  func.func @transform_1(%arg0: i32, %arg1: i32) -> (i32, i32) {
    %c0_i32 = arith.constant 0 : i32
    %c0_i32_0 = arith.constant 0 : i32
    %c0_i32_1 = arith.constant 0 : i32
    return %c0_i32, %c0_i32_0 : i32, i32
  }
  func.func @transform_2(%arg0: i32, %arg1: i32) -> i32 {
    %c0_i32 = arith.constant 0 : i32
    %c0_i32_0 = arith.constant 0 : i32
    return %c0_i32 : i32
  }
  func.func @transform_3(%arg0: i32, %arg1: i32) -> (i32, i32, i32, i32) {
    %c0_i32 = arith.constant 0 : i32
    %c0_i32_0 = arith.constant 0 : i32
    %c0_i32_1 = arith.constant 0 : i32
    return %arg0, %c0_i32, %arg1, %c0_i32_0 : i32, i32, i32, i32
  }
}

</mosaic_0001>

<llo_original>
// kernel: tpu_custom_call.1
$region0: #{tpu_custom_call.1}
  #allocation0 [shape = 'u32[]', space=smem, size = 0x4, offset = 0x4, fixed_abs, tag = 'smem constant byte address 0x4 - core index']
  #allocation1 [shape = 'u32[144,128]{1,0:T(1,128)}', space=vmem, size = 0x12000, scoped, tag = 'internal scratch']
  %s0 = inlined_call_operand.hbm [shape: bf16[2,8,132], index: 0, kind: input, shape index: {}]
  %s1 = inlined_call_operand.hbm [shape: bf16[132,768], index: 1, kind: input, shape index: {}]
  %s2 = inlined_call_operand.vmem [shape: f32[6], index: 2, kind: input, shape index: {}]
  %s3 = inlined_call_operand.hbm [shape: f32[2,6,8,128], index: 3, kind: output, shape index: {}]
  %s4 = sld [smem:[#allocation0]]
  $region57: #{tpu_custom_call.1} parent=0
    _
  %s6 = ssub.s32 1, %s4
  %s7 = scalar_select 0, %s6, %s4
  $region1: #{tpu_custom_call.1} parent=0
    #allocation2 [shape = 'u8[8192]{0}', space=vmem, size = 0x2000, scoped, tag = 'input window, operand 0']
    #allocation3 [shape = 's32[2]{0}', space=sflag, size = 0x8, scoped, tag = 'scoped memory for tpu_custom_call.1']
    #allocation4 [shape = 's32[2]{0}', space=sflag, size = 0x8, scoped, tag = 'scoped memory for tpu_custom_call.1']
    #allocation5 [shape = 's32[2]{0}', space=sflag, size = 0x8, scoped, tag = 'scoped memory for tpu_custom_call.1']
    #allocation6 [shape = 'u8[208896]{0}', space=vmem, size = 0x33000, scoped, tag = 'input window, operand 1, single buffered']
    #allocation7 [shape = 's32[1]{0}', space=sflag, size = 0x4, scoped, tag = 'scoped memory for tpu_custom_call.1']
    #allocation8 [shape = 'u8[512]{0}', space=smem, size = 0x200, scoped, tag = 'input window, operand 2, single buffered']
    #allocation9 [shape = 'u8[49152]{0}', space=vmem, size = 0xc000, scoped, tag = 'output window, operand 0']
    %8 = vsyncpa [#allocation3], 0
    %s9 = scalar_lea.sflag [#allocation3], 1
    %10 = vsyncpa %s9, 0
    %11 = vsyncpa [#allocation7], 0
    %12 = vsyncpa [#allocation5], 0
    %13 = vsyncpa [#allocation4], 0
    %s14 = scalar_lea.sflag [#allocation4], 1
    %15 = vsyncpa %s14, 0
    loop: start=0, step=1, limit=4
    $region2: #{tpu_custom_call.1} parent=1 // loop_pre_header
      _
    $region3: #{tpu_custom_call.1} parent=1 // loop_header
      %s17 = sphi 0, %s21
      %p18 = scmp.ge.s32.totalorder %s17, 4
      %s24 = sphi 0, %s36
      %s25 = sphi 0, %s32
      %s26 = sphi 0, %s24
      %s27 = sphi 0, %s25
      %s28 = sphi 0, %s26
      %s29 = sphi 0, %s27
      %s41 = sphi 0, %s43
      %s44 = sphi 0, %s41
      %s45 = sphi 0, %s44
      %s61 = sphi 0, %s45
      %s65 = sphi 0, %s65
      %s67 = sphi 0, %s65
      %s68 = sphi 0, %s67
      %s82 = sphi 0, %s68
      %s86 = sphi 0, %s86
      %s88 = sphi 0, %s86
      %s89 = sphi 0, %s88
      %s103 = sphi 0, %s89
      %s111 = sphi 0, %s113
      %s114 = sphi 0, %s111
      %s115 = sphi 0, %s114
      %s131 = sphi 0, %s115
    $region4: #{tpu_custom_call.1} parent=1 // loop_header_branch
      %20 = sbr.rel (%p18) target = $region8
    $region5: #{tpu_custom_call.1} parent=1 // loop_body
      %s22 = ssub.s32 %s17, 1
      %s23 = ssub.s32 %s17, 2
      %s30 = sadd.s32 1, %s25
      %p31 = scmp.ge.s32.totalorder %s30, 1
      %s32 = scalar_select %p31, 0, %s30
      %s33 = sadd.s32 1, %s24
      %s34 = scalar_select %p31, %s33, %s24
      %p35 = scmp.ge.s32.totalorder %s34, 2
      %s36 = scalar_select %p35, 0, %s34
      %s37 = ssub.s32 %s24, %s36
      %s38 = ssub.s32 %s25, %s32
      %s39 = sor.u32 %s37, %s38
      %p40 = scmp.eq.s32.totalorder %s39, 0
      %s42 = sadd.s32 %s41, 1
      %s43 = scalar_select %p40, %s41, %s42
      %p46 = pneg %p40
      %p47 = scmp.eq.s32.totalorder %s17, 1
      %p48 = por %p46, %p47
      %p49 = scmp.ne.s32.totalorder %s41, %s44
      %p50 = scmp.eq.s32.totalorder %s17, 0
      %p51 = por %p49, %p50
      %p52 = scmp.ne.s32.totalorder %s41, %s44
      %p53 = scmp.eq.s32.totalorder %s22, 1
      %p54 = por %p52, %p53
      %p55 = scmp.ne.s32.totalorder %s44, %s45
      %p56 = scmp.eq.s32.totalorder %s22, 0
      %p57 = por %p55, %p56
      %p58 = scmp.ne.s32.totalorder %s44, %s45
      %p59 = scmp.eq.s32.totalorder %s23, 1
      %p60 = por %p58, %p59
      %p62 = scmp.ne.s32.totalorder %s45, %s61
      %p63 = scmp.eq.s32.totalorder %s23, 0
      %p64 = por %p62, %p63
      %s66 = sadd.s32 %s65, 1
      %p69 = scmp.eq.s32.totalorder %s17, 1
      %p70 = scmp.ne.s32.totalorder %s65, %s67
      %p71 = scmp.eq.s32.totalorder %s17, 0
      %p72 = por %p70, %p71
      %p73 = scmp.ne.s32.totalorder %s65, %s67
      %p74 = scmp.eq.s32.totalorder %s22, 1
      %p75 = por %p73, %p74
      %p76 = scmp.ne.s32.totalorder %s67, %s68
      %p77 = scmp.eq.s32.totalorder %s22, 0
      %p78 = por %p76, %p77
      %p79 = scmp.ne.s32.totalorder %s67, %s68
      %p80 = scmp.eq.s32.totalorder %s23, 1
      %p81 = por %p79, %p80
      %p83 = scmp.ne.s32.totalorder %s68, %s82
      %p84 = scmp.eq.s32.totalorder %s23, 0
      %p85 = por %p83, %p84
      %s87 = sadd.s32 %s86, 1
      %p90 = scmp.eq.s32.totalorder %s17, 1
      %p91 = scmp.ne.s32.totalorder %s86, %s88
      %p92 = scmp.eq.s32.totalorder %s17, 0
      %p93 = por %p91, %p92
      %p94 = scmp.ne.s32.totalorder %s86, %s88
      %p95 = scmp.eq.s32.totalorder %s22, 1
      %p96 = por %p94, %p95
      %p97 = scmp.ne.s32.totalorder %s88, %s89
      %p98 = scmp.eq.s32.totalorder %s22, 0
      %p99 = por %p97, %p98
      %p100 = scmp.ne.s32.totalorder %s88, %s89
      %p101 = scmp.eq.s32.totalorder %s23, 1
      %p102 = por %p100, %p101
      %p104 = scmp.ne.s32.totalorder %s89, %s103
      %p105 = scmp.eq.s32.totalorder %s23, 0
      %p106 = por %p104, %p105
      %s107 = ssub.s32 %s24, %s36
      %s108 = ssub.s32 %s25, %s32
      %s109 = sor.u32 %s107, %s108
      %p110 = scmp.eq.s32.totalorder %s109, 0
      %s112 = sadd.s32 %s111, 1
      %s113 = scalar_select %p110, %s111, %s112
      %p116 = pneg %p110
      %p117 = scmp.eq.s32.totalorder %s17, 1
      %p118 = por %p116, %p117
      %p119 = scmp.ne.s32.totalorder %s111, %s114
      %p120 = scmp.eq.s32.totalorder %s17, 0
      %p121 = por %p119, %p120
      %p122 = scmp.ne.s32.totalorder %s111, %s114
      %p123 = scmp.eq.s32.totalorder %s22, 1
      %p124 = por %p122, %p123
      %p125 = scmp.ne.s32.totalorder %s114, %s115
      %p126 = scmp.eq.s32.totalorder %s22, 0
      %p127 = por %p125, %p126
      %p128 = scmp.ne.s32.totalorder %s114, %s115
      %p129 = scmp.eq.s32.totalorder %s23, 1
      %p130 = por %p128, %p129
      %p132 = scmp.ne.s32.totalorder %s115, %s131
      %p133 = scmp.eq.s32.totalorder %s23, 0
      %p134 = por %p132, %p133
      %p135 = scmp.le.s32.totalorder 1, %s17
      %p136 = scmp.lt.s32.totalorder %s17, 3
      %p137 = pnand %p135, %p136
      %p138 = pneg %p137
      // Predicated region
      $region9: #{tpu_custom_call.1} parent=5 // pred_check
        _
      $region10: #{tpu_custom_call.1} parent=5 // pred_check_branch
        %140 = sbr.rel (%p137) target = $region12
      $region11: #{tpu_custom_call.1} parent=5 // pred_region
        %s141 = ssub.s32 %s17, 1
        // Predicated region
        $region13: #{tpu_custom_call.1} parent=11 // pred_check
          %p142 = pneg %p78
        $region14: #{tpu_custom_call.1} parent=11 // pred_check_branch
          %144 = sbr.rel (%p142) target = $region16
        $region15: #{tpu_custom_call.1} parent=11 // pred_region
          %s146 = ssub.s32 6528, 6528
          %147 = vsyncadd [#allocation7], %s146
          %s148 = sshll.u32 [#allocation6], 4
          %s149 = int_to_ptr.vmem [resolvable:$true] %s148
          %154 = dma.hbm_to_vmem [thread:$0]  %s1, 6528, %s149, [#allocation7], 384, 384, 24
        $region16: #{tpu_custom_call.1} parent=11 // pred_fallthru
          _
        // Predicated region
        $region17: #{tpu_custom_call.1} parent=11 // pred_check
          %p155 = pneg %p99
        $region18: #{tpu_custom_call.1} parent=11 // pred_check_branch
          %157 = sbr.rel (%p155) target = $region20
        $region19: #{tpu_custom_call.1} parent=11 // pred_region
          %s159 = ssub.s32 16, 16
          %160 = vsyncadd [#allocation5], %s159
          %s162 = sshll.u32 %s2, 4
          %s163 = int_to_ptr.vmem [resolvable:$true] %s162
          %165 = dma.vmem_to_smem %s163, 16, [#allocation8], [#allocation5]
        $region20: #{tpu_custom_call.1} parent=11 // pred_fallthru
          _
      $region12: #{tpu_custom_call.1} parent=5 // pred_fallthru
        _
      %p166 = scmp.lt.s32.totalorder %s17, 2
      // Predicated region
      $region21: #{tpu_custom_call.1} parent=5 // pred_check
        %p167 = pneg %p166
      $region22: #{tpu_custom_call.1} parent=5 // pred_check_branch
        %169 = sbr.rel (%p167) target = $region24
      $region23: #{tpu_custom_call.1} parent=5 // pred_region
        // Predicated region
        $region25: #{tpu_custom_call.1} parent=23 // pred_check
          %p170 = pneg %p51
        $region26: #{tpu_custom_call.1} parent=23 // pred_check_branch
          %172 = sbr.rel (%p170) target = $region28
        $region27: #{tpu_custom_call.1} parent=23 // pred_region
          %s173 = sand.u32 %s41, 1
          %s174 = scalar_lea.sflag [#allocation3], %s173
          %s175 = sand.u32 %s41, 1
          %s176 = smul.addr %s175, 8
          %s177 = scalar_lea.vmem [#allocation2], %s176
          %s179 = ssub.s32 128, 128
          %180 = vsyncadd %s174, %s179
          %s181 = smul.addr %s25, 2
          %s182 = smul.addr %s24, 2
          %s183 = sadd.s32 %s181, %s182
          %s184 = smul.addr %s183, 64
          %s185 = scalar_lea.hbm %s0, %s184
          %s187 = sshll.u32 %s177, 4
          %s188 = int_to_ptr.vmem [resolvable:$true] %s187
          %190 = dma.hbm_to_vmem [thread:$0]  %s185, 128, %s188, %s174
        $region28: #{tpu_custom_call.1} parent=23 // pred_fallthru
          _
      $region24: #{tpu_custom_call.1} parent=5 // pred_fallthru
        _
      %p191 = scmp.le.s32.totalorder 1, %s17
      %p192 = scmp.lt.s32.totalorder %s17, 3
      %p193 = pnand %p191, %p192
      %p194 = pneg %p193
      // Predicated region
      $region29: #{tpu_custom_call.1} parent=5 // pred_check
        _
      $region30: #{tpu_custom_call.1} parent=5 // pred_check_branch
        %196 = sbr.rel (%p193) target = $region32
      $region31: #{tpu_custom_call.1} parent=5 // pred_region
        %s197 = ssub.s32 %s17, 1
        %s198 = sand.u32 %s44, 1
        %s199 = scalar_lea.sflag [#allocation3], %s198
        %s200 = sand.u32 %s44, 1
        %s201 = smul.addr %s200, 8
        %s202 = scalar_lea.vmem [#allocation2], %s201
        // Predicated region
        $region33: #{tpu_custom_call.1} parent=31 // pred_check
          %p203 = pneg %p57
        $region34: #{tpu_custom_call.1} parent=31 // pred_check_branch
          %205 = sbr.rel (%p203) target = $region36
        $region35: #{tpu_custom_call.1} parent=31 // pred_region
          %206 = dma.done %s199, 128
        $region36: #{tpu_custom_call.1} parent=31 // pred_fallthru
          _
        // Predicated region
        $region37: #{tpu_custom_call.1} parent=31 // pred_check
          %p207 = pneg %p78
        $region38: #{tpu_custom_call.1} parent=31 // pred_check_branch
          %209 = sbr.rel (%p207) target = $region40
        $region39: #{tpu_custom_call.1} parent=31 // pred_region
          %210 = dma.done [#allocation7], 6528
        $region40: #{tpu_custom_call.1} parent=31 // pred_fallthru
          _
        // Predicated region
        $region41: #{tpu_custom_call.1} parent=31 // pred_check
          %p211 = pneg %p99
        $region42: #{tpu_custom_call.1} parent=31 // pred_check_branch
          %213 = sbr.rel (%p211) target = $region44
        $region43: #{tpu_custom_call.1} parent=31 // pred_region
          %214 = dma.done [#allocation5], 16
        $region44: #{tpu_custom_call.1} parent=31 // pred_fallthru
          _
        %215 = sfence
        %s216 = sand.u32 %s44, 1
        %s217 = scalar_lea.sflag [#allocation3], %s216
        %s218 = sand.u32 %s44, 1
        %s219 = smul.addr %s218, 8
        %s220 = scalar_lea.vmem [#allocation2], %s219
        %p221 = pneg %p57
        %p222 = pneg %p54
        %p223 = pneg %p78
        %p224 = pneg %p75
        %p225 = pneg %p99
        %p226 = pneg %p96
        %p227 = pneg %p127
        %p228 = pneg %p124
        %s229 = sand.u32 %s114, 1
        %s230 = scalar_lea.sflag [#allocation4], %s229
        %s231 = sand.u32 %s114, 1
        %s232 = smul.addr %s231, 48
        %s233 = scalar_lea.vmem [#allocation9], %s232
        %v235 = vld [vmem:[%s202] sm:$0xff]
        %v236 = vld [vmem:[#allocation6] sm:$0xf]
        %v237 = vld [vmem:[#allocation6 + $0x18] sm:$0xf]
        %v238 = vld [vmem:[#allocation6 + $0x30] sm:$0xf]
        %v239 = vld [vmem:[#allocation6 + $0x48] sm:$0xf]
        %v240 = vld [vmem:[#allocation6 + $0x60] sm:$0xf]
        %v241 = vld [vmem:[#allocation6 + $0x78] sm:$0xf]
        %v242 = vld [vmem:[#allocation6 + $0x90] sm:$0xf]
        %v243 = vld [vmem:[#allocation6 + $0xa8] sm:$0xf]
        %v244 = vld [vmem:[#allocation6 + $0xc0] sm:$0xf]
        %v245 = vld [vmem:[#allocation6 + $0xd8] sm:$0xf]
        %v246 = vld [vmem:[#allocation6 + $0xf0] sm:$0xf]
        %v247 = vld [vmem:[#allocation6 + $0x108] sm:$0xf]
        %v248 = vld [vmem:[#allocation6 + $0x120] sm:$0xf]
        %v249 = vld [vmem:[#allocation6 + $0x138] sm:$0xf]
        %v250 = vld [vmem:[#allocation6 + $0x150] sm:$0xf]
        %v251 = vld [vmem:[#allocation6 + $0x168] sm:$0xf]
        %v252 = vld [vmem:[#allocation6 + $0x180] sm:$0x3]
        %s253 = sld [smem:[#allocation8]]
        %v254 = vstv %s253
        %v256 = vunpack.c.l.b16 %v235
        %v257 = vunpack.c.h.b16 %v235
        %v258 = vpack.c.b16 %v256, %v256
        %v259 = vpack.c.b16 %v257, %v257
        %v278 = vunpack.c.l.b16 %v236
        %v279 = vunpack.c.l.b16 %v237
        %v280 = vunpack.c.l.b16 %v238
        %v281 = vunpack.c.l.b16 %v239
        %v282 = vunpack.c.l.b16 %v240
        %v283 = vunpack.c.l.b16 %v241
        %v284 = vunpack.c.l.b16 %v242
        %v285 = vunpack.c.l.b16 %v243
        %v286 = vunpack.c.l.b16 %v244
        %v287 = vunpack.c.l.b16 %v245
        %v288 = vunpack.c.l.b16 %v246
        %v289 = vunpack.c.l.b16 %v247
        %v290 = vunpack.c.l.b16 %v248
        %v291 = vunpack.c.l.b16 %v249
        %v292 = vunpack.c.l.b16 %v250
        %v293 = vunpack.c.l.b16 %v251
        %v294 = vunpack.c.l.b16 %v252
        %v295 = vpack.c.b16 %v279, %v278
        %v296 = vpack.c.b16 %v281, %v280
        %v297 = vpack.c.b16 %v283, %v282
        %v298 = vpack.c.b16 %v285, %v284
        %v299 = vpack.c.b16 %v287, %v286
        %v300 = vpack.c.b16 %v289, %v288
        %v301 = vpack.c.b16 %v291, %v290
        %v302 = vpack.c.b16 %v293, %v292
        %v303 = vpack.c.b16 %v294, %v294
        %vm312 = vcmask 31744
        %v314 = vsel %vm312, %v259, 0
        %vm316 = vcmask 1041408
        %v318 = vsel %vm316, %v303, 0
        %320 = vmatprep.subr.bf16.mxu0 0
        %321 = vmatpush1.bf16.msra.mxu0 %v302
        %322 = vmatprep.subr.bf16.mxu0 0
        %323 = vmatpush1.bf16.msra.mxu0 %v301
        %324 = vmatprep.subr.bf16.mxu0 0
        %325 = vmatpush1.bf16.msra.mxu0 %v300
        %326 = vmatprep.subr.bf16.mxu0 0
        %327 = vmatpush1.bf16.msra.mxu0 %v299
        %328 = vmatprep.subr.bf16.mxu0 0
        %329 = vmatpush1.bf16.msra.mxu0 %v298
        %330 = vmatprep.subr.bf16.mxu0 0
        %331 = vmatpush1.bf16.msra.mxu0 %v297
        %332 = vmatprep.subr.bf16.mxu0 0
        %333 = vmatpush1.bf16.msra.mxu0 %v296
        %334 = vmatprep.subr.bf16.mxu0 0
        %335 = vmatpush1.bf16.msra.mxu0 %v295
        %336 = vmatprep.subr.bf16.mxu0 0
        %337 = vmatpush2.bf16.msra.mxu0 0
        %338 = vmatprep.subr.bf16.mxu0 0
        %339 = vmatpush2.bf16.msra.mxu0 0
        %340 = vmatprep.subr.bf16.mxu0 0
        %341 = vmatpush2.bf16.msra.mxu0 0
        %342 = vmatprep.subr.bf16.mxu0 0
        %343 = vmatpush2.bf16.msra.mxu0 0
        %344 = vmatprep.subr.bf16.mxu0 0
        %345 = vmatpush2.bf16.msra.mxu0 0
        %346 = vmatprep.subr.bf16.mxu0 0
        %347 = vmatpush2.bf16.msra.mxu0 0
        %348 = vmatprep.subr.bf16.mxu0 0
        %349 = vmatpush2.bf16.msra.mxu0 0
        %350 = vmatprep.subr.bf16.mxu0 0
        %351 = vmatpush2.bf16.msra.mxu0 %v318
        %352 = vmatprep.mubr.bf16.mxu0 %v314
        %353 = vmatmul.mubr.bf16.gmra.mxu0 %v258
        %v354 = vpop.f32.mrf.mxu0
        %v355 = vadd.f32 %v254, %v354
        %v356 = vpop.f32.mrf.mxu0
        %v357 = vpop.f32.mrf.mxu0
        %v358 = vpop.f32.mrf.mxu0
        %359 = vdwg.mxu0
        %360 = vst [vmem:[%s233] sm:$0xff] %v355
        %v361 = vld [vmem:[#allocation6 + $0x4] sm:$0xf]
        %v362 = vld [vmem:[#allocation6 + $0x1c] sm:$0xf]
        %v363 = vld [vmem:[#allocation6 + $0x34] sm:$0xf]
        %v364 = vld [vmem:[#allocation6 + $0x4c] sm:$0xf]
        %v365 = vld [vmem:[#allocation6 + $0x64] sm:$0xf]
        %v366 = vld [vmem:[#allocation6 + $0x7c] sm:$0xf]
        %v367 = vld [vmem:[#allocation6 + $0x94] sm:$0xf]
        %v368 = vld [vmem:[#allocation6 + $0xac] sm:$0xf]
        %v369 = vld [vmem:[#allocation6 + $0xc4] sm:$0xf]
        %v370 = vld [vmem:[#allocation6 + $0xdc] sm:$0xf]
        %v371 = vld [vmem:[#allocation6 + $0xf4] sm:$0xf]
        %v372 = vld [vmem:[#allocation6 + $0x10c] sm:$0xf]
        %v373 = vld [vmem:[#allocation6 + $0x124] sm:$0xf]
        %v374 = vld [vmem:[#allocation6 + $0x13c] sm:$0xf]
        %v375 = vld [vmem:[#allocation6 + $0x154] sm:$0xf]
        %v376 = vld [vmem:[#allocation6 + $0x16c] sm:$0xf]
        %v377 = vld [vmem:[#allocation6 + $0x184] sm:$0x3]
        %s378 = sld [smem:[#allocation8 + $0x1]]
        %v379 = vstv %s378
        %v397 = vunpack.c.l.b16 %v361
        %v398 = vunpack.c.l.b16 %v362
        %v399 = vunpack.c.l.b16 %v363
        %v400 = vunpack.c.l.b16 %v364
        %v401 = vunpack.c.l.b16 %v365
        %v402 = vunpack.c.l.b16 %v366
        %v403 = vunpack.c.l.b16 %v367
        %v404 = vunpack.c.l.b16 %v368
        %v405 = vunpack.c.l.b16 %v369
        %v406 = vunpack.c.l.b16 %v370
        %v407 = vunpack.c.l.b16 %v371
        %v408 = vunpack.c.l.b16 %v372
        %v409 = vunpack.c.l.b16 %v373
        %v410 = vunpack.c.l.b16 %v374
        %v411 = vunpack.c.l.b16 %v375
        %v412 = vunpack.c.l.b16 %v376
        %v413 = vunpack.c.l.b16 %v377
        %v414 = vpack.c.b16 %v398, %v397
        %v415 = vpack.c.b16 %v400, %v399
        %v416 = vpack.c.b16 %v402, %v401
        %v417 = vpack.c.b16 %v404, %v403
        %v418 = vpack.c.b16 %v406, %v405
        %v419 = vpack.c.b16 %v408, %v407
        %v420 = vpack.c.b16 %v410, %v409
        %v421 = vpack.c.b16 %v412, %v411
        %v422 = vpack.c.b16 %v413, %v413
        %v432 = vsel %vm316, %v422, 0
        %434 = vmatprep.subr.bf16.mxu0 0
        %435 = vmatpush1.bf16.msra.mxu0 %v421
        %436 = vmatprep.subr.bf16.mxu0 0
        %437 = vmatpush1.bf16.msra.mxu0 %v420
        %438 = vmatprep.subr.bf16.mxu0 0
        %439 = vmatpush1.bf16.msra.mxu0 %v419
        %440 = vmatprep.subr.bf16.mxu0 0
        %441 = vmatpush1.bf16.msra.mxu0 %v418
        %442 = vmatprep.subr.bf16.mxu0 0
        %443 = vmatpush1.bf16.msra.mxu0 %v417
        %444 = vmatprep.subr.bf16.mxu0 0
        %445 = vmatpush1.bf16.msra.mxu0 %v416
        %446 = vmatprep.subr.bf16.mxu0 0
        %447 = vmatpush1.bf16.msra.mxu0 %v415
        %448 = vmatprep.subr.bf16.mxu0 0
        %449 = vmatpush1.bf16.msra.mxu0 %v414
        %450 = vmatprep.subr.bf16.mxu0 0
        %451 = vmatpush2.bf16.msra.mxu0 0
        %452 = vmatprep.subr.bf16.mxu0 0
        %453 = vmatpush2.bf16.msra.mxu0 0
        %454 = vmatprep.subr.bf16.mxu0 0
        %455 = vmatpush2.bf16.msra.mxu0 0
        %456 = vmatprep.subr.bf16.mxu0 0
        %457 = vmatpush2.bf16.msra.mxu0 0
        %458 = vmatprep.subr.bf16.mxu0 0
        %459 = vmatpush2.bf16.msra.mxu0 0
        %460 = vmatprep.subr.bf16.mxu0 0
        %461 = vmatpush2.bf16.msra.mxu0 0
        %462 = vmatprep.subr.bf16.mxu0 0
        %463 = vmatpush2.bf16.msra.mxu0 0
        %464 = vmatprep.subr.bf16.mxu0 0
        %465 = vmatpush2.bf16.msra.mxu0 %v432
        %466 = vmatprep.mubr.bf16.mxu0 %v314
        %467 = vmatmul.mubr.bf16.gmra.mxu0 %v258
        %v468 = vpop.f32.mrf.mxu0
        %v469 = vadd.f32 %v379, %v468
        %v470 = vpop.f32.mrf.mxu0
        %v471 = vpop.f32.mrf.mxu0
        %v472 = vpop.f32.mrf.mxu0
        %473 = vdwg.mxu0
        %s474 = scalar_lea.vmem %s233, 8 [#allocation9]
        %475 = vst [vmem:[%s474] sm:$0xff] %v469
        %v476 = vld [vmem:[#allocation6 + $0x8] sm:$0xf]
        %v477 = vld [vmem:[#allocation6 + $0x20] sm:$0xf]
        %v478 = vld [vmem:[#allocation6 + $0x38] sm:$0xf]
        %v479 = vld [vmem:[#allocation6 + $0x50] sm:$0xf]
        %v480 = vld [vmem:[#allocation6 + $0x68] sm:$0xf]
        %v481 = vld [vmem:[#allocation6 + $0x80] sm:$0xf]
        %v482 = vld [vmem:[#allocation6 + $0x98] sm:$0xf]
        %v483 = vld [vmem:[#allocation6 + $0xb0] sm:$0xf]
        %v484 = vld [vmem:[#allocation6 + $0xc8] sm:$0xf]
        %v485 = vld [vmem:[#allocation6 + $0xe0] sm:$0xf]
        %v486 = vld [vmem:[#allocation6 + $0xf8] sm:$0xf]
        %v487 = vld [vmem:[#allocation6 + $0x110] sm:$0xf]
        %v488 = vld [vmem:[#allocation6 + $0x128] sm:$0xf]
        %v489 = vld [vmem:[#allocation6 + $0x140] sm:$0xf]
        %v490 = vld [vmem:[#allocation6 + $0x158] sm:$0xf]
        %v491 = vld [vmem:[#allocation6 + $0x170] sm:$0xf]
        %v492 = vld [vmem:[#allocation6 + $0x188] sm:$0x3]
        %s493 = sld [smem:[#allocation8 + $0x2]]
        %v494 = vstv %s493
        %v512 = vunpack.c.l.b16 %v476
        %v513 = vunpack.c.l.b16 %v477
        %v514 = vunpack.c.l.b16 %v478
        %v515 = vunpack.c.l.b16 %v479
        %v516 = vunpack.c.l.b16 %v480
        %v517 = vunpack.c.l.b16 %v481
        %v518 = vunpack.c.l.b16 %v482
        %v519 = vunpack.c.l.b16 %v483
        %v520 = vunpack.c.l.b16 %v484
        %v521 = vunpack.c.l.b16 %v485
        %v522 = vunpack.c.l.b16 %v486
        %v523 = vunpack.c.l.b16 %v487
        %v524 = vunpack.c.l.b16 %v488
        %v525 = vunpack.c.l.b16 %v489
        %v526 = vunpack.c.l.b16 %v490
        %v527 = vunpack.c.l.b16 %v491
        %v528 = vunpack.c.l.b16 %v492
        %v529 = vpack.c.b16 %v513, %v512
        %v530 = vpack.c.b16 %v515, %v514
        %v531 = vpack.c.b16 %v517, %v516
        %v532 = vpack.c.b16 %v519, %v518
        %v533 = vpack.c.b16 %v521, %v520
        %v534 = vpack.c.b16 %v523, %v522
        %v535 = vpack.c.b16 %v525, %v524
        %v536 = vpack.c.b16 %v527, %v526
        %v537 = vpack.c.b16 %v528, %v528
        %v547 = vsel %vm316, %v537, 0
        %549 = vmatprep.subr.bf16.mxu0 0
        %550 = vmatpush1.bf16.msra.mxu0 %v536
        %551 = vmatprep.subr.bf16.mxu0 0
        %552 = vmatpush1.bf16.msra.mxu0 %v535
        %553 = vmatprep.subr.bf16.mxu0 0
        %554 = vmatpush1.bf16.msra.mxu0 %v534
        %555 = vmatprep.subr.bf16.mxu0 0
        %556 = vmatpush1.bf16.msra.mxu0 %v533
        %557 = vmatprep.subr.bf16.mxu0 0
        %558 = vmatpush1.bf16.msra.mxu0 %v532
        %559 = vmatprep.subr.bf16.mxu0 0
        %560 = vmatpush1.bf16.msra.mxu0 %v531
        %561 = vmatprep.subr.bf16.mxu0 0
        %562 = vmatpush1.bf16.msra.mxu0 %v530
        %563 = vmatprep.subr.bf16.mxu0 0
        %564 = vmatpush1.bf16.msra.mxu0 %v529
        %565 = vmatprep.subr.bf16.mxu0 0
        %566 = vmatpush2.bf16.msra.mxu0 0
        %567 = vmatprep.subr.bf16.mxu0 0
        %568 = vmatpush2.bf16.msra.mxu0 0
        %569 = vmatprep.subr.bf16.mxu0 0
        %570 = vmatpush2.bf16.msra.mxu0 0
        %571 = vmatprep.subr.bf16.mxu0 0
        %572 = vmatpush2.bf16.msra.mxu0 0
        %573 = vmatprep.subr.bf16.mxu0 0
        %574 = vmatpush2.bf16.msra.mxu0 0
        %575 = vmatprep.subr.bf16.mxu0 0
        %576 = vmatpush2.bf16.msra.mxu0 0
        %577 = vmatprep.subr.bf16.mxu0 0
        %578 = vmatpush2.bf16.msra.mxu0 0
        %579 = vmatprep.subr.bf16.mxu0 0
        %580 = vmatpush2.bf16.msra.mxu0 %v547
        %581 = vmatprep.mubr.bf16.mxu0 %v314
        %582 = vmatmul.mubr.bf16.gmra.mxu0 %v258
        %v583 = vpop.f32.mrf.mxu0
        %v584 = vadd.f32 %v494, %v583
        %v585 = vpop.f32.mrf.mxu0
        %v586 = vpop.f32.mrf.mxu0
        %v587 = vpop.f32.mrf.mxu0
        %588 = vdwg.mxu0
        %s589 = scalar_lea.vmem %s233, 16 [#allocation9]
        %590 = vst [vmem:[%s589] sm:$0xff] %v584
        %v591 = vld [vmem:[#allocation6 + $0xc] sm:$0xf]
        %v592 = vld [vmem:[#allocation6 + $0x24] sm:$0xf]
        %v593 = vld [vmem:[#allocation6 + $0x3c] sm:$0xf]
        %v594 = vld [vmem:[#allocation6 + $0x54] sm:$0xf]
        %v595 = vld [vmem:[#allocation6 + $0x6c] sm:$0xf]
        %v596 = vld [vmem:[#allocation6 + $0x84] sm:$0xf]
        %v597 = vld [vmem:[#allocation6 + $0x9c] sm:$0xf]
        %v598 = vld [vmem:[#allocation6 + $0xb4] sm:$0xf]
        %v599 = vld [vmem:[#allocation6 + $0xcc] sm:$0xf]
        %v600 = vld [vmem:[#allocation6 + $0xe4] sm:$0xf]
        %v601 = vld [vmem:[#allocation6 + $0xfc] sm:$0xf]
        %v602 = vld [vmem:[#allocation6 + $0x114] sm:$0xf]
        %v603 = vld [vmem:[#allocation6 + $0x12c] sm:$0xf]
        %v604 = vld [vmem:[#allocation6 + $0x144] sm:$0xf]
        %v605 = vld [vmem:[#allocation6 + $0x15c] sm:$0xf]
        %v606 = vld [vmem:[#allocation6 + $0x174] sm:$0xf]
        %v607 = vld [vmem:[#allocation6 + $0x18c] sm:$0x3]
        %s608 = sld [smem:[#allocation8 + $0x3]]
        %v609 = vstv %s608
        %v627 = vunpack.c.l.b16 %v591
        %v628 = vunpack.c.l.b16 %v592
        %v629 = vunpack.c.l.b16 %v593
        %v630 = vunpack.c.l.b16 %v594
        %v631 = vunpack.c.l.b16 %v595
        %v632 = vunpack.c.l.b16 %v596
        %v633 = vunpack.c.l.b16 %v597
        %v634 = vunpack.c.l.b16 %v598
        %v635 = vunpack.c.l.b16 %v599
        %v636 = vunpack.c.l.b16 %v600
        %v637 = vunpack.c.l.b16 %v601
        %v638 = vunpack.c.l.b16 %v602
        %v639 = vunpack.c.l.b16 %v603
        %v640 = vunpack.c.l.b16 %v604
        %v641 = vunpack.c.l.b16 %v605
        %v642 = vunpack.c.l.b16 %v606
        %v643 = vunpack.c.l.b16 %v607
        %v644 = vpack.c.b16 %v628, %v627
        %v645 = vpack.c.b16 %v630, %v629
        %v646 = vpack.c.b16 %v632, %v631
        %v647 = vpack.c.b16 %v634, %v633
        %v648 = vpack.c.b16 %v636, %v635
        %v649 = vpack.c.b16 %v638, %v637
        %v650 = vpack.c.b16 %v640, %v639
        %v651 = vpack.c.b16 %v642, %v641
        %v652 = vpack.c.b16 %v643, %v643
        %v662 = vsel %vm316, %v652, 0
        %664 = vmatprep.subr.bf16.mxu0 0
        %665 = vmatpush1.bf16.msra.mxu0 %v651
        %666 = vmatprep.subr.bf16.mxu0 0
        %667 = vmatpush1.bf16.msra.mxu0 %v650
        %668 = vmatprep.subr.bf16.mxu0 0
        %669 = vmatpush1.bf16.msra.mxu0 %v649
        %670 = vmatprep.subr.bf16.mxu0 0
        %671 = vmatpush1.bf16.msra.mxu0 %v648
        %672 = vmatprep.subr.bf16.mxu0 0
        %673 = vmatpush1.bf16.msra.mxu0 %v647
        %674 = vmatprep.subr.bf16.mxu0 0
        %675 = vmatpush1.bf16.msra.mxu0 %v646
        %676 = vmatprep.subr.bf16.mxu0 0
        %677 = vmatpush1.bf16.msra.mxu0 %v645
        %678 = vmatprep.subr.bf16.mxu0 0
        %679 = vmatpush1.bf16.msra.mxu0 %v644
        %680 = vmatprep.subr.bf16.mxu0 0
        %681 = vmatpush2.bf16.msra.mxu0 0
        %682 = vmatprep.subr.bf16.mxu0 0
        %683 = vmatpush2.bf16.msra.mxu0 0
        %684 = vmatprep.subr.bf16.mxu0 0
        %685 = vmatpush2.bf16.msra.mxu0 0
        %686 = vmatprep.subr.bf16.mxu0 0
        %687 = vmatpush2.bf16.msra.mxu0 0
        %688 = vmatprep.subr.bf16.mxu0 0
        %689 = vmatpush2.bf16.msra.mxu0 0
        %690 = vmatprep.subr.bf16.mxu0 0
        %691 = vmatpush2.bf16.msra.mxu0 0
        %692 = vmatprep.subr.bf16.mxu0 0
        %693 = vmatpush2.bf16.msra.mxu0 0
        %694 = vmatprep.subr.bf16.mxu0 0
        %695 = vmatpush2.bf16.msra.mxu0 %v662
        %696 = vmatprep.mubr.bf16.mxu0 %v314
        %697 = vmatmul.mubr.bf16.gmra.mxu0 %v258
        %v698 = vpop.f32.mrf.mxu0
        %v699 = vadd.f32 %v609, %v698
        %v700 = vpop.f32.mrf.mxu0
        %v701 = vpop.f32.mrf.mxu0
        %v702 = vpop.f32.mrf.mxu0
        %703 = vdwg.mxu0
        %s704 = scalar_lea.vmem %s233, 24 [#allocation9]
        %705 = vst [vmem:[%s704] sm:$0xff] %v699
        %v706 = vld [vmem:[#allocation6 + $0x10] sm:$0xf]
        %v707 = vld [vmem:[#allocation6 + $0x28] sm:$0xf]
        %v708 = vld [vmem:[#allocation6 + $0x40] sm:$0xf]
        %v709 = vld [vmem:[#allocation6 + $0x58] sm:$0xf]
        %v710 = vld [vmem:[#allocation6 + $0x70] sm:$0xf]
        %v711 = vld [vmem:[#allocation6 + $0x88] sm:$0xf]
        %v712 = vld [vmem:[#allocation6 + $0xa0] sm:$0xf]
        %v713 = vld [vmem:[#allocation6 + $0xb8] sm:$0xf]
        %v714 = vld [vmem:[#allocation6 + $0xd0] sm:$0xf]
        %v715 = vld [vmem:[#allocation6 + $0xe8] sm:$0xf]
        %v716 = vld [vmem:[#allocation6 + $0x100] sm:$0xf]
        %v717 = vld [vmem:[#allocation6 + $0x118] sm:$0xf]
        %v718 = vld [vmem:[#allocation6 + $0x130] sm:$0xf]
        %v719 = vld [vmem:[#allocation6 + $0x148] sm:$0xf]
        %v720 = vld [vmem:[#allocation6 + $0x160] sm:$0xf]
        %v721 = vld [vmem:[#allocation6 + $0x178] sm:$0xf]
        %v722 = vld [vmem:[#allocation6 + $0x190] sm:$0x3]
        %s723 = sld [smem:[#allocation8 + $0x4]]
        %v724 = vstv %s723
        %v742 = vunpack.c.l.b16 %v706
        %v743 = vunpack.c.l.b16 %v707
        %v744 = vunpack.c.l.b16 %v708
        %v745 = vunpack.c.l.b16 %v709
        %v746 = vunpack.c.l.b16 %v710
        %v747 = vunpack.c.l.b16 %v711
        %v748 = vunpack.c.l.b16 %v712
        %v749 = vunpack.c.l.b16 %v713
        %v750 = vunpack.c.l.b16 %v714
        %v751 = vunpack.c.l.b16 %v715
        %v752 = vunpack.c.l.b16 %v716
        %v753 = vunpack.c.l.b16 %v717
        %v754 = vunpack.c.l.b16 %v718
        %v755 = vunpack.c.l.b16 %v719
        %v756 = vunpack.c.l.b16 %v720
        %v757 = vunpack.c.l.b16 %v721
        %v758 = vunpack.c.l.b16 %v722
        %v759 = vpack.c.b16 %v743, %v742
        %v760 = vpack.c.b16 %v745, %v744
        %v761 = vpack.c.b16 %v747, %v746
        %v762 = vpack.c.b16 %v749, %v748
        %v763 = vpack.c.b16 %v751, %v750
        %v764 = vpack.c.b16 %v753, %v752
        %v765 = vpack.c.b16 %v755, %v754
        %v766 = vpack.c.b16 %v757, %v756
        %v767 = vpack.c.b16 %v758, %v758
        %v777 = vsel %vm316, %v767, 0
        %779 = vmatprep.subr.bf16.mxu0 0
        %780 = vmatpush1.bf16.msra.mxu0 %v766
        %781 = vmatprep.subr.bf16.mxu0 0
        %782 = vmatpush1.bf16.msra.mxu0 %v765
        %783 = vmatprep.subr.bf16.mxu0 0
        %784 = vmatpush1.bf16.msra.mxu0 %v764
        %785 = vmatprep.subr.bf16.mxu0 0
        %786 = vmatpush1.bf16.msra.mxu0 %v763
        %787 = vmatprep.subr.bf16.mxu0 0
        %788 = vmatpush1.bf16.msra.mxu0 %v762
        %789 = vmatprep.subr.bf16.mxu0 0
        %790 = vmatpush1.bf16.msra.mxu0 %v761
        %791 = vmatprep.subr.bf16.mxu0 0
        %792 = vmatpush1.bf16.msra.mxu0 %v760
        %793 = vmatprep.subr.bf16.mxu0 0
        %794 = vmatpush1.bf16.msra.mxu0 %v759
        %795 = vmatprep.subr.bf16.mxu0 0
        %796 = vmatpush2.bf16.msra.mxu0 0
        %797 = vmatprep.subr.bf16.mxu0 0
        %798 = vmatpush2.bf16.msra.mxu0 0
        %799 = vmatprep.subr.bf16.mxu0 0
        %800 = vmatpush2.bf16.msra.mxu0 0
        %801 = vmatprep.subr.bf16.mxu0 0
        %802 = vmatpush2.bf16.msra.mxu0 0
        %803 = vmatprep.subr.bf16.mxu0 0
        %804 = vmatpush2.bf16.msra.mxu0 0
        %805 = vmatprep.subr.bf16.mxu0 0
        %806 = vmatpush2.bf16.msra.mxu0 0
        %807 = vmatprep.subr.bf16.mxu0 0
        %808 = vmatpush2.bf16.msra.mxu0 0
        %809 = vmatprep.subr.bf16.mxu0 0
        %810 = vmatpush2.bf16.msra.mxu0 %v777
        %811 = vmatprep.mubr.bf16.mxu0 %v314
        %812 = vmatmul.mubr.bf16.gmra.mxu0 %v258
        %v813 = vpop.f32.mrf.mxu0
        %v814 = vadd.f32 %v724, %v813
        %v815 = vpop.f32.mrf.mxu0
        %v816 = vpop.f32.mrf.mxu0
        %v817 = vpop.f32.mrf.mxu0
        %818 = vdwg.mxu0
        %s819 = scalar_lea.vmem %s233, 32 [#allocation9]
        %820 = vst [vmem:[%s819] sm:$0xff] %v814
        %v821 = vld [vmem:[#allocation6 + $0x14] sm:$0xf]
        %v822 = vld [vmem:[#allocation6 + $0x2c] sm:$0xf]
        %v823 = vld [vmem:[#allocation6 + $0x44] sm:$0xf]
        %v824 = vld [vmem:[#allocation6 + $0x5c] sm:$0xf]
        %v825 = vld [vmem:[#allocation6 + $0x74] sm:$0xf]
        %v826 = vld [vmem:[#allocation6 + $0x8c] sm:$0xf]
        %v827 = vld [vmem:[#allocation6 + $0xa4] sm:$0xf]
        %v828 = vld [vmem:[#allocation6 + $0xbc] sm:$0xf]
        %v829 = vld [vmem:[#allocation6 + $0xd4] sm:$0xf]
        %v830 = vld [vmem:[#allocation6 + $0xec] sm:$0xf]
        %v831 = vld [vmem:[#allocation6 + $0x104] sm:$0xf]
        %v832 = vld [vmem:[#allocation6 + $0x11c] sm:$0xf]
        %v833 = vld [vmem:[#allocation6 + $0x134] sm:$0xf]
        %v834 = vld [vmem:[#allocation6 + $0x14c] sm:$0xf]
        %v835 = vld [vmem:[#allocation6 + $0x164] sm:$0xf]
        %v836 = vld [vmem:[#allocation6 + $0x17c] sm:$0xf]
        %v837 = vld [vmem:[#allocation6 + $0x194] sm:$0x3]
        %s838 = sld [smem:[#allocation8 + $0x5]]
        %v839 = vstv %s838
        %v857 = vunpack.c.l.b16 %v821
        %v858 = vunpack.c.l.b16 %v822
        %v859 = vunpack.c.l.b16 %v823
        %v860 = vunpack.c.l.b16 %v824
        %v861 = vunpack.c.l.b16 %v825
        %v862 = vunpack.c.l.b16 %v826
        %v863 = vunpack.c.l.b16 %v827
        %v864 = vunpack.c.l.b16 %v828
        %v865 = vunpack.c.l.b16 %v829
        %v866 = vunpack.c.l.b16 %v830
        %v867 = vunpack.c.l.b16 %v831
        %v868 = vunpack.c.l.b16 %v832
        %v869 = vunpack.c.l.b16 %v833
        %v870 = vunpack.c.l.b16 %v834
        %v871 = vunpack.c.l.b16 %v835
        %v872 = vunpack.c.l.b16 %v836
        %v873 = vunpack.c.l.b16 %v837
        %v874 = vpack.c.b16 %v858, %v857
        %v875 = vpack.c.b16 %v860, %v859
        %v876 = vpack.c.b16 %v862, %v861
        %v877 = vpack.c.b16 %v864, %v863
        %v878 = vpack.c.b16 %v866, %v865
        %v879 = vpack.c.b16 %v868, %v867
        %v880 = vpack.c.b16 %v870, %v869
        %v881 = vpack.c.b16 %v872, %v871
        %v882 = vpack.c.b16 %v873, %v873
        %v892 = vsel %vm316, %v882, 0
        %894 = vmatprep.subr.bf16.mxu0 0
        %895 = vmatpush1.bf16.msra.mxu0 %v881
        %896 = vmatprep.subr.bf16.mxu0 0
        %897 = vmatpush1.bf16.msra.mxu0 %v880
        %898 = vmatprep.subr.bf16.mxu0 0
        %899 = vmatpush1.bf16.msra.mxu0 %v879
        %900 = vmatprep.subr.bf16.mxu0 0
        %901 = vmatpush1.bf16.msra.mxu0 %v878
        %902 = vmatprep.subr.bf16.mxu0 0
        %903 = vmatpush1.bf16.msra.mxu0 %v877
        %904 = vmatprep.subr.bf16.mxu0 0
        %905 = vmatpush1.bf16.msra.mxu0 %v876
        %906 = vmatprep.subr.bf16.mxu0 0
        %907 = vmatpush1.bf16.msra.mxu0 %v875
        %908 = vmatprep.subr.bf16.mxu0 0
        %909 = vmatpush1.bf16.msra.mxu0 %v874
        %910 = vmatprep.subr.bf16.mxu0 0
        %911 = vmatpush2.bf16.msra.mxu0 0
        %912 = vmatprep.subr.bf16.mxu0 0
        %913 = vmatpush2.bf16.msra.mxu0 0
        %914 = vmatprep.subr.bf16.mxu0 0
        %915 = vmatpush2.bf16.msra.mxu0 0
        %916 = vmatprep.subr.bf16.mxu0 0
        %917 = vmatpush2.bf16.msra.mxu0 0
        %918 = vmatprep.subr.bf16.mxu0 0
        %919 = vmatpush2.bf16.msra.mxu0 0
        %920 = vmatprep.subr.bf16.mxu0 0
        %921 = vmatpush2.bf16.msra.mxu0 0
        %922 = vmatprep.subr.bf16.mxu0 0
        %923 = vmatpush2.bf16.msra.mxu0 0
        %924 = vmatprep.subr.bf16.mxu0 0
        %925 = vmatpush2.bf16.msra.mxu0 %v892
        %926 = vmatprep.mubr.bf16.mxu0 %v314
        %927 = vmatmul.mubr.bf16.gmra.mxu0 %v258
        %v928 = vpop.f32.mrf.mxu0
        %v929 = vadd.f32 %v839, %v928
        %v930 = vpop.f32.mrf.mxu0
        %v931 = vpop.f32.mrf.mxu0
        %v932 = vpop.f32.mrf.mxu0
        %933 = vdwg.mxu0
        %s934 = scalar_lea.vmem %s233, 40 [#allocation9]
        %935 = vst [vmem:[%s934] sm:$0xff] %v929
        %s936 = sand.u32 %s114, 1
        %s937 = scalar_lea.sflag [#allocation4], %s936
        %s938 = sand.u32 %s114, 1
        %s939 = smul.addr %s938, 48
        %s940 = scalar_lea.vmem [#allocation9], %s939
        // Predicated region
        $region45: #{tpu_custom_call.1} parent=31 // pred_check
          %p941 = pneg %p124
        $region46: #{tpu_custom_call.1} parent=31 // pred_check_branch
          %943 = sbr.rel (%p941) target = $region48
        $region47: #{tpu_custom_call.1} parent=31 // pred_region
          %s945 = ssub.s32 768, 768
          %946 = vsyncadd %s937, %s945
          %s947 = smul.addr %s26, 6
          %s948 = sadd.s32 %s27, %s947
          %s949 = smul.addr %s948, 128
          %s950 = scalar_lea.hbm %s3, %s949
          %s951 = sshll.u32 %s940, 4
          %s952 = int_to_ptr.vmem [resolvable:$true] %s951
          %957 = dma.vmem_to_hbm [thread:$0]  %s952, 768, %s950, %s937, 128, 128, 8
        $region48: #{tpu_custom_call.1} parent=31 // pred_fallthru
          _
      $region32: #{tpu_custom_call.1} parent=5 // pred_fallthru
        _
      %p958 = scmp.le.s32.totalorder 2, %s17
      // Predicated region
      $region49: #{tpu_custom_call.1} parent=5 // pred_check
        %p959 = pneg %p958
      $region50: #{tpu_custom_call.1} parent=5 // pred_check_branch
        %961 = sbr.rel (%p959) target = $region52
      $region51: #{tpu_custom_call.1} parent=5 // pred_region
        %s962 = ssub.s32 %s17, 2
        // Predicated region
        $region53: #{tpu_custom_call.1} parent=51 // pred_check
          %p963 = pneg %p130
        $region54: #{tpu_custom_call.1} parent=51 // pred_check_branch
          %965 = sbr.rel (%p963) target = $region56
        $region55: #{tpu_custom_call.1} parent=51 // pred_region
          %s966 = sand.u32 %s115, 1
          %s967 = scalar_lea.sflag [#allocation4], %s966
          %s968 = sand.u32 %s115, 1
          %s969 = smul.addr %s968, 48
          %s970 = scalar_lea.vmem [#allocation9], %s969
          %971 = dma.done %s967, 768
        $region56: #{tpu_custom_call.1} parent=51 // pred_fallthru
          _
      $region52: #{tpu_custom_call.1} parent=5 // pred_fallthru
        _
    $region6: #{tpu_custom_call.1} parent=1 // loop_footer
      %s21 = sadd.s32 1, %s17
    $region7: #{tpu_custom_call.1} parent=1 // loop_footer_branch
      %16 = sbr.rel target = $region3
    $region8: #{tpu_custom_call.1} parent=1 // loop_exit
      _
    %972 = vsyncpa [#allocation3], 1
    %s973 = scalar_lea.sflag [#allocation3], 1
    %974 = vsyncpa %s973, 1
    %975 = vsyncpa [#allocation7], 1
    %976 = vsyncpa [#allocation4], 1
    %s977 = scalar_lea.sflag [#allocation4], 1
    %978 = vsyncpa %s977, 1
    %979 = vsyncpa [#allocation5], 1
    %s980 = scalar_lea.sflag [#allocation5], 1
    %981 = vsyncpa %s980, 1

</llo_original>
